<compile_context>
chip_gen: v6e
topology: v6e:2x2x1
jax: 0.10.0
libtpu: 0.0.40
codegen_flags: <defaults>
</compile_context>

<pallas_src>
import functools

import jax
import jax.numpy as jnp
from jax.experimental import pallas as pl
from jax.experimental.pallas import tpu as pltpu


def _round_up(x, m):
    return ((x + m - 1) // m) * m


# ----------------------------------------------------------------------------
# Kernel
# ----------------------------------------------------------------------------
def _make_kernel(OP, HP, OUTP, compute_dtype):
    """Build the fused forward kernel for padded sizes OP/HP/OUTP (all mult. of 128)."""
    r2 = OP            # W2 row offset in the packed weight buffer
    rh = OP + HP       # fused head-hidden weight (wp1|wv1) row offset
    ro = OP + 2 * HP   # block-diagonal head-output weight row offset

    def kernel(obs_ref, w_ref, b_ref, out_ref):
        x = obs_ref[...]                                   # (TB, OP), compute dtype

        # Static, tile-aligned slices of the packed parameter buffers (free).
        w1 = w_ref[0:OP, 0:HP]
        w2 = w_ref[r2:r2 + HP, 0:HP]
        wh = w_ref[rh:rh + HP, 0:2 * HP]                   # [wp1 | wv1]
        wo = w_ref[ro:ro + 2 * HP, 0:OUTP]                 # [[wp2, 0], [0, wv2]]
        b1 = b_ref[0:1, 0:HP]
        b2 = b_ref[1:2, 0:HP]
        bh = b_ref[2:3, 0:2 * HP]
        bo = b_ref[3:4, 0:OUTP]

        # shared trunk: Linear -> ReLU -> Linear -> ReLU  (f32 accumulation)
        z = jnp.maximum(
            jnp.dot(x, w1, preferred_element_type=jnp.float32) + b1, 0.0)
        z = jnp.maximum(
            jnp.dot(z.astype(compute_dtype), w2,
                    preferred_element_type=jnp.float32) + b2, 0.0)

        # fused policy/value hidden layer: one (TB,HP) x (HP,2HP) matmul
        h = jnp.maximum(
            jnp.dot(z.astype(compute_dtype), wh,
                    preferred_element_type=jnp.float32) + bh, 0.0)

        # fused head outputs: (TB,2HP) x (2HP,OUTP) block-diagonal matmul
        out = jnp.dot(h.astype(compute_dtype), wo,
                      preferred_element_type=jnp.float32) + bo

        out_ref[...] = out.astype(out_ref.dtype)           # lane-dense store

    return kernel


# ----------------------------------------------------------------------------
# Parameter packing (done once, host/XLA side)
# ----------------------------------------------------------------------------
def pack_params(params, obs_size, action_size, hidden_size, *, use_bf16=False):
    """Pack the 12 parameter tensors into two 128-padded contiguous buffers.

    Weight buffer rows:  [W1 (OP) | W2 (HP) | Wh (HP) | Wo (2HP)]
    Bias buffer rows:    [b1, b2, bh, bo, 0...]  (8, COLS)
    """
    OP = _round_up(obs_size, 128)
    HP = _round_up(hidden_size, 128)
    OUTP = _round_up(action_size + 1, 128)
    COLS = max(2 * HP, OUTP)
    w_dtype = jnp.bfloat16 if use_bf16 else jnp.float32

    H, A = hidden_size, action_size
    r2 = OP
    rh = OP + HP
    ro = OP + 2 * HP

    W = jnp.zeros((OP + 4 * HP, COLS), jnp.float32)
    W = W.at[0:obs_size, 0:H].set(params["w1"])
    W = W.at[r2:r2 + H, 0:H].set(params["w2"])
    W = W.at[rh:rh + H, 0:H].set(params["wp1"])
    W = W.at[rh:rh + H, HP:HP + H].set(params["wv1"])
    W = W.at[ro:ro + H, 0:A].set(params["wp2"])
    W = W.at[ro + HP:ro + HP + H, A:A + 1].set(params["wv2"])
    W = W.astype(w_dtype)

    Bp = jnp.zeros((8, COLS), jnp.float32)          # biases stay f32
    Bp = Bp.at[0, 0:H].set(params["b1"][0])
    Bp = Bp.at[1, 0:H].set(params["b2"][0])
    Bp = Bp.at[2, 0:H].set(params["bp1"][0])
    Bp = Bp.at[2, HP:HP + H].set(params["bv1"][0])
    Bp = Bp.at[3, 0:A].set(params["bp2"][0])
    Bp = Bp.at[3, A:A + 1].set(params["bv2"][0])
    return W, Bp


# ----------------------------------------------------------------------------
# Forward wrapper
# ----------------------------------------------------------------------------
@functools.partial(
    jax.jit,
    static_argnames=("action_size", "hidden_size", "use_bf16", "batch_tile"))
def fc_actor_critic_forward(obs, w_packed, b_packed, *, action_size,
                            hidden_size=64, use_bf16=False, batch_tile=512):
    """obs: (B, obs_size) f32. w_packed/b_packed from pack_params.

    Returns (policy_logits (B, A) f32, value (B, 1) f32)."""
    B, obs_dim = obs.shape
    OP = _round_up(obs_dim, 128)
    HP = _round_up(hidden_size, 128)
    OUTP = _round_up(action_size + 1, 128)
    compute_dtype = jnp.bfloat16 if use_bf16 else jnp.float32

    # Batch tiling: big tiles, padded batch, one grid axis (parallel -> megacore).
    TB = min(batch_tile, _round_up(B, 8))
    B_pad = _round_up(B, TB)

    # Zero-pad obs to lane/sublane-aligned shape and cast to the MXU dtype.
    obs_p = jnp.zeros((B_pad, OP), compute_dtype)
    obs_p = obs_p.at[:B, :obs_dim].set(obs.astype(compute_dtype))

    kernel = _make_kernel(OP, HP, OUTP, compute_dtype)

    out = pl.pallas_call(
        kernel,
        out_shape=jax.ShapeDtypeStruct((B_pad, OUTP), jnp.float32),
        grid=(B_pad // TB,),
        in_specs=[
            pl.BlockSpec((TB, OP), lambda i: (i, 0)),          # obs: tiled over batch
            pl.BlockSpec(w_packed.shape, lambda i: (0, 0)),    # weights: VMEM-resident
            pl.BlockSpec(b_packed.shape, lambda i: (0, 0)),    # biases: VMEM-resident
        ],
        out_specs=pl.BlockSpec((TB, OUTP), lambda i: (i, 0)),  # lane-dense output
        compiler_params=pltpu.CompilerParams(
            dimension_semantics=("parallel",)),
    )(obs_p, w_packed, b_packed)

    logits = out[:B, :action_size]
    value = out[:B, action_size:action_size + 1]
    return logits, value


# ----------------------------------------------------------------------------
# Init (mirrors PyTorch nn.Linear default: uniform +/- 1/sqrt(fan_in)).
# Weights stored pre-transposed to (in, out); biases as (1, out).
# ----------------------------------------------------------------------------
def init_params(key, obs_space_size, action_space_size, hidden_size=64):
    def linear(key, fan_in, fan_out):
        kw, kb = jax.random.split(key)
        bound = 1.0 / jnp.sqrt(fan_in)
        w = jax.random.uniform(kw, (fan_in, fan_out), jnp.float32,
                               minval=-bound, maxval=bound)
        b = jax.random.uniform(kb, (1, fan_out), jnp.float32,
                               minval=-bound, maxval=bound)
        return w, b

    keys = jax.random.split(key, 6)
    w1, b1 = linear(keys[0], obs_space_size, hidden_size)
    w2, b2 = linear(keys[1], hidden_size, hidden_size)
    wp1, bp1 = linear(keys[2], hidden_size, hidden_size)
    wp2, bp2 = linear(keys[3], hidden_size, action_space_size)
    wv1, bv1 = linear(keys[4], hidden_size, hidden_size)
    wv2, bv2 = linear(keys[5], hidden_size, 1)
    return {
        "w1": w1, "b1": b1, "w2": w2, "b2": b2,
        "wp1": wp1, "bp1": bp1, "wp2": wp2, "bp2": bp2,
        "wv1": wv1, "bv1": bv1, "wv2": wv2, "bv2": bv2,
    }


def _reference_forward(obs, params):
    z = jnp.maximum(obs @ params["w1"] + params["b1"], 0.0)
    z = jnp.maximum(z @ params["w2"] + params["b2"], 0.0)
    p = jnp.maximum(z @ params["wp1"] + params["bp1"], 0.0)
    logits = p @ params["wp2"] + params["bp2"]
    v = jnp.maximum(z @ params["wv1"] + params["bv1"], 0.0)
    value = v @ params["wv2"] + params["bv2"]
    return logits, value


if __name__ == "__main__":
    OBS_SIZE = 16
    ACTION_SIZE = 6
    HIDDEN = 32
    BATCH = 8

    key = jax.random.PRNGKey(0)
    k_obs, k_params = jax.random.split(key)

    obs = jax.random.normal(k_obs, (BATCH, OBS_SIZE), dtype=jnp.float32)
    params = init_params(k_params, OBS_SIZE, ACTION_SIZE, hidden_size=HIDDEN)
    ref_logits, ref_value = _reference_forward(obs, params)

    # f32 path (exact): bitwise-equivalent math to the PyTorch module.
    w_packed, b_packed = pack_params(params, OBS_SIZE, ACTION_SIZE, HIDDEN,
                                     use_bf16=False)
    logits, value = fc_actor_critic_forward(
        obs, w_packed, b_packed,
        action_size=ACTION_SIZE, hidden_size=HIDDEN, use_bf16=False)
    jax.block_until_ready((logits, value))

    assert logits.shape == (BATCH, ACTION_SIZE)
    assert value.shape == (BATCH, 1)
    assert jnp.allclose(logits, ref_logits, atol=1e-5, rtol=1e-5)
    assert jnp.allclose(value, ref_value, atol=1e-5, rtol=1e-5)

    # bf16 MXU path (v6e/v7x-oriented): f32 accumulation, loose tolerance.
    w_bf16, b_bf16 = pack_params(params, OBS_SIZE, ACTION_SIZE, HIDDEN,
                                 use_bf16=True)
    logits_bf, value_bf = fc_actor_critic_forward(
        obs, w_bf16, b_bf16,
        action_size=ACTION_SIZE, hidden_size=HIDDEN, use_bf16=True)
    jax.block_until_ready((logits_bf, value_bf))
    assert jnp.allclose(logits_bf, ref_logits, atol=1e-1, rtol=1e-1)
    assert jnp.allclose(value_bf, ref_value, atol=1e-1, rtol=1e-1)

    print("KERNEL_OK")
</pallas_src>

<mosaic_0001>
module attributes {stable_mosaic.version = 11 : i64} {
  func.func @kernel(%arg0: i32, %arg1: memref<8x128xf32, #tpu.memory_space<vmem>>, %arg2: memref<640x256xf32, #tpu.memory_space<vmem>>, %arg3: memref<8x256xf32, #tpu.memory_space<vmem>>, %arg4: memref<8x128xf32, #tpu.memory_space<vmem>>) attributes {dimension_semantics = [#tpu.dimension_semantics<parallel>], iteration_bounds = array<i64: 1>, scalar_prefetch = 0 : i64, scratch_operands = 0 : i64, tpu.core_type = #tpu.core_type<tc>, window_params = [{transform_indices = @transform_0, window_bounds = array<i64: 8, 128>}, {pipeline_mode = #tpu.pipeline_mode<synchronous>, transform_indices = @transform_1, window_bounds = array<i64: 640, 256>}, {pipeline_mode = #tpu.pipeline_mode<synchronous>, transform_indices = @transform_2, window_bounds = array<i64: 8, 256>}, {transform_indices = @transform_3, window_bounds = array<i64: 8, 128>}]} {
    %c0 = arith.constant 0 : index
    %c0_0 = arith.constant 0 : index
    %0 = vector.load %arg1[%c0, %c0_0] : memref<8x128xf32, #tpu.memory_space<vmem>>, vector<8x128xf32>
    %c0_1 = arith.constant 0 : index
    %c0_2 = arith.constant 0 : index
    %1 = vector.load %arg2[%c0_1, %c0_2] : memref<640x256xf32, #tpu.memory_space<vmem>>, vector<128x128xf32>
    %c128 = arith.constant 128 : index
    %c0_3 = arith.constant 0 : index
    %2 = vector.load %arg2[%c128, %c0_3] : memref<640x256xf32, #tpu.memory_space<vmem>>, vector<128x128xf32>
    %c256 = arith.constant 256 : index
    %c0_4 = arith.constant 0 : index
    %3 = vector.load %arg2[%c256, %c0_4] : memref<640x256xf32, #tpu.memory_space<vmem>>, vector<128x256xf32>
    %c384 = arith.constant 384 : index
    %c0_5 = arith.constant 0 : index
    %4 = vector.load %arg2[%c384, %c0_5] : memref<640x256xf32, #tpu.memory_space<vmem>>, vector<256x128xf32>
    %c0_6 = arith.constant 0 : index
    %c0_7 = arith.constant 0 : index
    %5 = vector.load %arg3[%c0_6, %c0_7] : memref<8x256xf32, #tpu.memory_space<vmem>>, vector<1x128xf32>
    %c1 = arith.constant 1 : index
    %c0_8 = arith.constant 0 : index
    %6 = vector.load %arg3[%c1, %c0_8] : memref<8x256xf32, #tpu.memory_space<vmem>>, vector<1x128xf32>
    %c2 = arith.constant 2 : index
    %c0_9 = arith.constant 0 : index
    %7 = vector.load %arg3[%c2, %c0_9] : memref<8x256xf32, #tpu.memory_space<vmem>>, vector<1x256xf32>
    %c3 = arith.constant 3 : index
    %c0_10 = arith.constant 0 : index
    %8 = vector.load %arg3[%c3, %c0_10] : memref<8x256xf32, #tpu.memory_space<vmem>>, vector<1x128xf32>
    %cst = arith.constant dense<0.000000e+00> : vector<8x128xf32>
    %9 = tpu.matmul %0, %1, %cst {dimension_numbers = #tpu.dot_dimension_numbers<[1], [0], [0], [1], [0, 0, 1, 1], [], []>} : vector<8x128xf32>, vector<128x128xf32>, vector<8x128xf32> -> vector<8x128xf32>
    %10 = vector.broadcast %5 : vector<1x128xf32> to vector<8x128xf32>
    %11 = arith.addf %9, %10 : vector<8x128xf32>
    %cst_11 = arith.constant 0.000000e+00 : f32
    %12 = vector.broadcast %cst_11 : f32 to vector<8x128xf32>
    %13 = arith.maximumf %11, %12 : vector<8x128xf32>
    %cst_12 = arith.constant dense<0.000000e+00> : vector<8x128xf32>
    %14 = tpu.matmul %13, %2, %cst_12 {dimension_numbers = #tpu.dot_dimension_numbers<[1], [0], [0], [1], [0, 0, 1, 1], [], []>} : vector<8x128xf32>, vector<128x128xf32>, vector<8x128xf32> -> vector<8x128xf32>
    %15 = vector.broadcast %6 : vector<1x128xf32> to vector<8x128xf32>
    %16 = arith.addf %14, %15 : vector<8x128xf32>
    %cst_13 = arith.constant 0.000000e+00 : f32
    %17 = vector.broadcast %cst_13 : f32 to vector<8x128xf32>
    %18 = arith.maximumf %16, %17 : vector<8x128xf32>
    %cst_14 = arith.constant dense<0.000000e+00> : vector<8x256xf32>
    %19 = tpu.matmul %18, %3, %cst_14 {dimension_numbers = #tpu.dot_dimension_numbers<[1], [0], [0], [1], [0, 0, 1, 1], [], []>} : vector<8x128xf32>, vector<128x256xf32>, vector<8x256xf32> -> vector<8x256xf32>
    %20 = vector.broadcast %7 : vector<1x256xf32> to vector<8x256xf32>
    %21 = arith.addf %19, %20 : vector<8x256xf32>
    %cst_15 = arith.constant 0.000000e+00 : f32
    %22 = vector.broadcast %cst_15 : f32 to vector<8x256xf32>
    %23 = arith.maximumf %21, %22 : vector<8x256xf32>
    %cst_16 = arith.constant dense<0.000000e+00> : vector<8x128xf32>
    %24 = tpu.matmul %23, %4, %cst_16 {dimension_numbers = #tpu.dot_dimension_numbers<[1], [0], [0], [1], [0, 0, 1, 1], [], []>} : vector<8x256xf32>, vector<256x128xf32>, vector<8x128xf32> -> vector<8x128xf32>
    %25 = vector.broadcast %8 : vector<1x128xf32> to vector<8x128xf32>
    %26 = arith.addf %24, %25 : vector<8x128xf32>
    %c0_17 = arith.constant 0 : index
    %c0_18 = arith.constant 0 : index
    %27 = vector.load %arg4[%c0_17, %c0_18] : memref<8x128xf32, #tpu.memory_space<vmem>>, vector<8x128xf32>
    tpu.vector_store %arg4[%c0_17, %c0_18], %26 {strides = array<i32>} : memref<8x128xf32, #tpu.memory_space<vmem>>, vector<8x128xf32>,
    return
  }
  func.func @transform_0(%arg0: i32) -> (i32, i32) {
    %c0_i32 = arith.constant 0 : i32
    %c0_i32_0 = arith.constant 0 : i32
    return %arg0, %c0_i32 : i32, i32
  }
  func.func @transform_1(%arg0: i32) -> (i32, i32) {
    %c0_i32 = arith.constant 0 : i32
    %c0_i32_0 = arith.constant 0 : i32
    %c0_i32_1 = arith.constant 0 : i32
    return %c0_i32, %c0_i32_0 : i32, i32
  }
  func.func @transform_2(%arg0: i32) -> (i32, i32) {
    %c0_i32 = arith.constant 0 : i32
    %c0_i32_0 = arith.constant 0 : i32
    %c0_i32_1 = arith.constant 0 : i32
    return %c0_i32, %c0_i32_0 : i32, i32
  }
  func.func @transform_3(%arg0: i32) -> (i32, i32) {
    %c0_i32 = arith.constant 0 : i32
    %c0_i32_0 = arith.constant 0 : i32
    return %arg0, %c0_i32 : i32, i32
  }
}

</mosaic_0001>

<llo_original>
// kernel: fc_actor_critic_forward.1
$region0: #{fc_actor_critic_forward.1}
  #allocation0 [shape = 'u32[]', space=smem, size = 0x4, offset = 0x4, fixed_abs, tag = 'smem constant byte address 0x4 - core index']
  #allocation1 [shape = 'u32[144,128]{1,0:T(1,128)}', space=vmem, size = 0x12000, scoped, tag = 'internal scratch']
  %s0 = inlined_call_operand.vmem [shape: f32[8,128], index: 0, kind: input, shape index: {}]
  %s1 = inlined_call_operand.hbm [shape: f32[640,256], index: 1, kind: input, shape index: {}]
  %s2 = inlined_call_operand.vmem [shape: f32[8,256], index: 2, kind: input, shape index: {}]
  %s3 = inlined_call_operand.vmem [shape: f32[8,128], index: 3, kind: output, shape index: {}]
  %s4 = sld [smem:[#allocation0]]
  $region26: #{fc_actor_critic_forward.1} parent=0
    _
  %s6 = ssub.s32 1, %s4
  %s7 = scalar_select 0, %s6, %s4
  $region1: #{fc_actor_critic_forward.1} parent=0
    #allocation2 [shape = 'u8[655360]{0}', space=vmem, size = 0xa0000, scoped, tag = 'input window, operand 1, single buffered']
    #allocation3 [shape = 's32[1]{0}', space=sflag, size = 0x4, scoped, tag = 'scoped memory for fc_actor_critic_forward.1']
    %8 = vsyncpa [#allocation3], 0
    // Predicated region
    $region2: #{fc_actor_critic_forward.1} parent=1 // pred_check
      _
    $region3: #{fc_actor_critic_forward.1} parent=1 // pred_check_branch
      %10 = sbr.rel (0) target = $region5
    $region4: #{fc_actor_critic_forward.1} parent=1 // pred_region
      _
    $region5: #{fc_actor_critic_forward.1} parent=1 // pred_fallthru
      _
    // Predicated region
    $region6: #{fc_actor_critic_forward.1} parent=1 // pred_check
      _
    $region7: #{fc_actor_critic_forward.1} parent=1 // pred_check_branch
      %12 = sbr.rel (0) target = $region9
    $region8: #{fc_actor_critic_forward.1} parent=1 // pred_region
      %s14 = ssub.s32 20480, 20480
      %15 = vsyncadd [#allocation3], %s14
      %s16 = sshll.u32 [#allocation2], 4
      %s17 = int_to_ptr.vmem [resolvable:$true] %s16
      %22 = dma.hbm_to_vmem [thread:$0]  %s1, 20480, %s17, [#allocation3], 256, 256, 16
    $region9: #{fc_actor_critic_forward.1} parent=1 // pred_fallthru
      _
    // Predicated region
    $region10: #{fc_actor_critic_forward.1} parent=1 // pred_check
      _
    $region11: #{fc_actor_critic_forward.1} parent=1 // pred_check_branch
      %24 = sbr.rel (0) target = $region13
    $region12: #{fc_actor_critic_forward.1} parent=1 // pred_region
      _
    $region13: #{fc_actor_critic_forward.1} parent=1 // pred_fallthru
      _
    // Predicated region
    $region14: #{fc_actor_critic_forward.1} parent=1 // pred_check
      _
    $region15: #{fc_actor_critic_forward.1} parent=1 // pred_check_branch
      %26 = sbr.rel (0) target = $region17
    $region16: #{fc_actor_critic_forward.1} parent=1 // pred_region
      %27 = dma.done [#allocation3], 20480
    $region17: #{fc_actor_critic_forward.1} parent=1 // pred_fallthru
      _
    %v28 = vld [vmem:[%s0] sm:$0xff]
    %v29 = vld [vmem:[#allocation2] sm:$0xff]
    %v30 = vld [vmem:[#allocation2 + $0x10] sm:$0xff]
    %v31 = vld [vmem:[#allocation2 + $0x20] sm:$0xff]
    %v32 = vld [vmem:[#allocation2 + $0x30] sm:$0xff]
    %v33 = vld [vmem:[#allocation2 + $0x40] sm:$0xff]
    %v34 = vld [vmem:[#allocation2 + $0x50] sm:$0xff]
    %v35 = vld [vmem:[#allocation2 + $0x60] sm:$0xff]
    %v36 = vld [vmem:[#allocation2 + $0x70] sm:$0xff]
    %v37 = vld [vmem:[#allocation2 + $0x80] sm:$0xff]
    %v38 = vld [vmem:[#allocation2 + $0x90] sm:$0xff]
    %v39 = vld [vmem:[#allocation2 + $0xa0] sm:$0xff]
    %v40 = vld [vmem:[#allocation2 + $0xb0] sm:$0xff]
    %v41 = vld [vmem:[#allocation2 + $0xc0] sm:$0xff]
    %v42 = vld [vmem:[#allocation2 + $0xd0] sm:$0xff]
    %v43 = vld [vmem:[#allocation2 + $0xe0] sm:$0xff]
    %v44 = vld [vmem:[#allocation2 + $0xf0] sm:$0xff]
    %v45 = vld [vmem:[#allocation2 + $0x100] sm:$0xff]
    %v46 = vld [vmem:[#allocation2 + $0x110] sm:$0xff]
    %v47 = vld [vmem:[#allocation2 + $0x120] sm:$0xff]
    %v48 = vld [vmem:[#allocation2 + $0x130] sm:$0xff]
    %v49 = vld [vmem:[#allocation2 + $0x140] sm:$0xff]
    %v50 = vld [vmem:[#allocation2 + $0x150] sm:$0xff]
    %v51 = vld [vmem:[#allocation2 + $0x160] sm:$0xff]
    %v52 = vld [vmem:[#allocation2 + $0x170] sm:$0xff]
    %v53 = vld [vmem:[#allocation2 + $0x180] sm:$0xff]
    %v54 = vld [vmem:[#allocation2 + $0x190] sm:$0xff]
    %v55 = vld [vmem:[#allocation2 + $0x1a0] sm:$0xff]
    %v56 = vld [vmem:[#allocation2 + $0x1b0] sm:$0xff]
    %v57 = vld [vmem:[#allocation2 + $0x1c0] sm:$0xff]
    %v58 = vld [vmem:[#allocation2 + $0x1d0] sm:$0xff]
    %v59 = vld [vmem:[#allocation2 + $0x1e0] sm:$0xff]
    %v60 = vld [vmem:[#allocation2 + $0x1f0] sm:$0xff]
    %v61 = vld [vmem:[#allocation2 + $0x200] sm:$0xff]
    %v62 = vld [vmem:[#allocation2 + $0x208] sm:$0xff]
    %v63 = vld [vmem:[#allocation2 + $0x210] sm:$0xff]
    %v64 = vld [vmem:[#allocation2 + $0x218] sm:$0xff]
    %v65 = vld [vmem:[#allocation2 + $0x220] sm:$0xff]
    %v66 = vld [vmem:[#allocation2 + $0x228] sm:$0xff]
    %v67 = vld [vmem:[#allocation2 + $0x230] sm:$0xff]
    %v68 = vld [vmem:[#allocation2 + $0x238] sm:$0xff]
    %v69 = vld [vmem:[#allocation2 + $0x240] sm:$0xff]
    %v70 = vld [vmem:[#allocation2 + $0x248] sm:$0xff]
    %v71 = vld [vmem:[#allocation2 + $0x250] sm:$0xff]
    %v72 = vld [vmem:[#allocation2 + $0x258] sm:$0xff]
    %v73 = vld [vmem:[#allocation2 + $0x260] sm:$0xff]
    %v74 = vld [vmem:[#allocation2 + $0x268] sm:$0xff]
    %v75 = vld [vmem:[#allocation2 + $0x270] sm:$0xff]
    %v76 = vld [vmem:[#allocation2 + $0x278] sm:$0xff]
    %v77 = vld [vmem:[#allocation2 + $0x280] sm:$0xff]
    %v78 = vld [vmem:[#allocation2 + $0x288] sm:$0xff]
    %v79 = vld [vmem:[#allocation2 + $0x290] sm:$0xff]
    %v80 = vld [vmem:[#allocation2 + $0x298] sm:$0xff]
    %v81 = vld [vmem:[#allocation2 + $0x2a0] sm:$0xff]
    %v82 = vld [vmem:[#allocation2 + $0x2a8] sm:$0xff]
    %v83 = vld [vmem:[#allocation2 + $0x2b0] sm:$0xff]
    %v84 = vld [vmem:[#allocation2 + $0x2b8] sm:$0xff]
    %v85 = vld [vmem:[#allocation2 + $0x2c0] sm:$0xff]
    %v86 = vld [vmem:[#allocation2 + $0x2c8] sm:$0xff]
    %v87 = vld [vmem:[#allocation2 + $0x2d0] sm:$0xff]
    %v88 = vld [vmem:[#allocation2 + $0x2d8] sm:$0xff]
    %v89 = vld [vmem:[#allocation2 + $0x2e0] sm:$0xff]
    %v90 = vld [vmem:[#allocation2 + $0x2e8] sm:$0xff]
    %v91 = vld [vmem:[#allocation2 + $0x2f0] sm:$0xff]
    %v92 = vld [vmem:[#allocation2 + $0x2f8] sm:$0xff]
    %v93 = vld [vmem:[#allocation2 + $0x300] sm:$0xff]
    %v94 = vld [vmem:[#allocation2 + $0x310] sm:$0xff]
    %v95 = vld [vmem:[#allocation2 + $0x320] sm:$0xff]
    %v96 = vld [vmem:[#allocation2 + $0x330] sm:$0xff]
    %v97 = vld [vmem:[#allocation2 + $0x340] sm:$0xff]
    %v98 = vld [vmem:[#allocation2 + $0x350] sm:$0xff]
    %v99 = vld [vmem:[#allocation2 + $0x360] sm:$0xff]
    %v100 = vld [vmem:[#allocation2 + $0x370] sm:$0xff]
    %v101 = vld [vmem:[#allocation2 + $0x380] sm:$0xff]
    %v102 = vld [vmem:[#allocation2 + $0x390] sm:$0xff]
    %v103 = vld [vmem:[#allocation2 + $0x3a0] sm:$0xff]
    %v104 = vld [vmem:[#allocation2 + $0x3b0] sm:$0xff]
    %v105 = vld [vmem:[#allocation2 + $0x3c0] sm:$0xff]
    %v106 = vld [vmem:[#allocation2 + $0x3d0] sm:$0xff]
    %v107 = vld [vmem:[#allocation2 + $0x3e0] sm:$0xff]
    %v108 = vld [vmem:[#allocation2 + $0x3f0] sm:$0xff]
    %v109 = vld [vmem:[#allocation2 + $0x400] sm:$0xff]
    %v110 = vld [vmem:[#allocation2 + $0x410] sm:$0xff]
    %v111 = vld [vmem:[#allocation2 + $0x420] sm:$0xff]
    %v112 = vld [vmem:[#allocation2 + $0x430] sm:$0xff]
    %v113 = vld [vmem:[#allocation2 + $0x440] sm:$0xff]
    %v114 = vld [vmem:[#allocation2 + $0x450] sm:$0xff]
    %v115 = vld [vmem:[#allocation2 + $0x460] sm:$0xff]
    %v116 = vld [vmem:[#allocation2 + $0x470] sm:$0xff]
    %v117 = vld [vmem:[#allocation2 + $0x480] sm:$0xff]
    %v118 = vld [vmem:[#allocation2 + $0x490] sm:$0xff]
    %v119 = vld [vmem:[#allocation2 + $0x4a0] sm:$0xff]
    %v120 = vld [vmem:[#allocation2 + $0x4b0] sm:$0xff]
    %v121 = vld [vmem:[#allocation2 + $0x4c0] sm:$0xff]
    %v122 = vld [vmem:[#allocation2 + $0x4d0] sm:$0xff]
    %v123 = vld [vmem:[#allocation2 + $0x4e0] sm:$0xff]
    %v124 = vld [vmem:[#allocation2 + $0x4f0] sm:$0xff]
    %v125 = vld [vmem:[%s2] ss:$0 sm:$0xff]
    %v126 = vld [vmem:[%s2 + $0x1] ss:$0 sm:$0xff]
    %s127 = scalar_lea.vmem %s2, 2
    %v128 = vld [vmem:[%s127] ss:$8 sm:$0x3]
    %v129 = vld [vmem:[%s2 + $0x3] ss:$0 sm:$0xff]
    %130 = vmatprep.subr.mxu0 0.0
    %131 = vmatpush1.msra.mxu0 %v44
    %132 = vmatprep.subr.mxu0 0.0
    %133 = vmatpush1.msra.mxu0 %v43
    %134 = vmatprep.subr.mxu0 0.0
    %135 = vmatpush1.msra.mxu0 %v42
    %136 = vmatprep.subr.mxu0 0.0
    %137 = vmatpush1.msra.mxu0 %v41
    %138 = vmatprep.subr.mxu0 0.0
    %139 = vmatpush1.msra.mxu0 %v40
    %140 = vmatprep.subr.mxu0 0.0
    %141 = vmatpush1.msra.mxu0 %v39
    %142 = vmatprep.subr.mxu0 0.0
    %143 = vmatpush1.msra.mxu0 %v38
    %144 = vmatprep.subr.mxu0 0.0
    %145 = vmatpush1.msra.mxu0 %v37
    %146 = vmatprep.subr.mxu0 0.0
    %147 = vmatpush1.msra.mxu0 %v36
    %148 = vmatprep.subr.mxu0 0.0
    %149 = vmatpush1.msra.mxu0 %v35
    %150 = vmatprep.subr.mxu0 0.0
    %151 = vmatpush1.msra.mxu0 %v34
    %152 = vmatprep.subr.mxu0 0.0
    %153 = vmatpush1.msra.mxu0 %v33
    %154 = vmatprep.subr.mxu0 0.0
    %155 = vmatpush1.msra.mxu0 %v32
    %156 = vmatprep.subr.mxu0 0.0
    %157 = vmatpush1.msra.mxu0 %v31
    %158 = vmatprep.subr.mxu0 0.0
    %159 = vmatpush1.msra.mxu0 %v30
    %160 = vmatprep.subr.mxu0 0.0
    %161 = vmatpush1.msra.mxu0 %v29
    %162 = vmatprep.subr.mxu0 0.0
    %163 = vmatpush2.msra.mxu0 0.0
    %164 = vmatprep.subr.mxu0 0.0
    %165 = vmatpush2.msra.mxu0 0.0
    %166 = vmatprep.subr.mxu0 0.0
    %167 = vmatpush2.msra.mxu0 0.0
    %168 = vmatprep.subr.mxu0 0.0
    %169 = vmatpush2.msra.mxu0 0.0
    %170 = vmatprep.subr.mxu0 0.0
    %171 = vmatpush2.msra.mxu0 0.0
    %172 = vmatprep.subr.mxu0 0.0
    %173 = vmatpush2.msra.mxu0 0.0
    %174 = vmatprep.subr.mxu0 0.0
    %175 = vmatpush2.msra.mxu0 0.0
    %176 = vmatprep.subr.mxu0 0.0
    %177 = vmatpush2.msra.mxu0 0.0
    %178 = vmatprep.subr.mxu0 0.0
    %179 = vmatpush2.msra.mxu0 0.0
    %180 = vmatprep.subr.mxu0 0.0
    %181 = vmatpush2.msra.mxu0 0.0
    %182 = vmatprep.subr.mxu0 0.0
    %183 = vmatpush2.msra.mxu0 0.0
    %184 = vmatprep.subr.mxu0 0.0
    %185 = vmatpush2.msra.mxu0 0.0
    %186 = vmatprep.subr.mxu0 0.0
    %187 = vmatpush2.msra.mxu0 0.0
    %188 = vmatprep.subr.mxu0 0.0
    %189 = vmatpush2.msra.mxu0 0.0
    %190 = vmatprep.subr.mxu0 0.0
    %191 = vmatpush2.msra.mxu0 0.0
    %192 = vmatprep.subr.mxu0 0.0
    %193 = vmatpush2.msra.mxu0 0.0
    %194 = vmatprep.mubr.f32.mxu0 0.0
    %195 = vmatmul.mubr.f32.gmra.mxu0 %v28
    %v196 = vpop.f32.mrf.mxu0
    %v197 = vadd.f32 %v125, %v196
    %v198 = vpop.f32.mrf.mxu0
    %199 = vdwg.mxu0
    %v200 = vmax.f32 %v197, 0.0
    %201 = vmatprep.subr.mxu0 0.0
    %202 = vmatpush1.msra.mxu0 %v60
    %203 = vmatprep.subr.mxu0 0.0
    %204 = vmatpush1.msra.mxu0 %v59
    %205 = vmatprep.subr.mxu0 0.0
    %206 = vmatpush1.msra.mxu0 %v58
    %207 = vmatprep.subr.mxu0 0.0
    %208 = vmatpush1.msra.mxu0 %v57
    %209 = vmatprep.subr.mxu0 0.0
    %210 = vmatpush1.msra.mxu0 %v56
    %211 = vmatprep.subr.mxu0 0.0
    %212 = vmatpush1.msra.mxu0 %v55
    %213 = vmatprep.subr.mxu0 0.0
    %214 = vmatpush1.msra.mxu0 %v54
    %215 = vmatprep.subr.mxu0 0.0
    %216 = vmatpush1.msra.mxu0 %v53
    %217 = vmatprep.subr.mxu0 0.0
    %218 = vmatpush1.msra.mxu0 %v52
    %219 = vmatprep.subr.mxu0 0.0
    %220 = vmatpush1.msra.mxu0 %v51
    %221 = vmatprep.subr.mxu0 0.0
    %222 = vmatpush1.msra.mxu0 %v50
    %223 = vmatprep.subr.mxu0 0.0
    %224 = vmatpush1.msra.mxu0 %v49
    %225 = vmatprep.subr.mxu0 0.0
    %226 = vmatpush1.msra.mxu0 %v48
    %227 = vmatprep.subr.mxu0 0.0
    %228 = vmatpush1.msra.mxu0 %v47
    %229 = vmatprep.subr.mxu0 0.0
    %230 = vmatpush1.msra.mxu0 %v46
    %231 = vmatprep.subr.mxu0 0.0
    %232 = vmatpush1.msra.mxu0 %v45
    %233 = vmatprep.subr.mxu0 0.0
    %234 = vmatpush2.msra.mxu0 0.0
    %235 = vmatprep.subr.mxu0 0.0
    %236 = vmatpush2.msra.mxu0 0.0
    %237 = vmatprep.subr.mxu0 0.0
    %238 = vmatpush2.msra.mxu0 0.0
    %239 = vmatprep.subr.mxu0 0.0
    %240 = vmatpush2.msra.mxu0 0.0
    %241 = vmatprep.subr.mxu0 0.0
    %242 = vmatpush2.msra.mxu0 0.0
    %243 = vmatprep.subr.mxu0 0.0
    %244 = vmatpush2.msra.mxu0 0.0
    %245 = vmatprep.subr.mxu0 0.0
    %246 = vmatpush2.msra.mxu0 0.0
    %247 = vmatprep.subr.mxu0 0.0
    %248 = vmatpush2.msra.mxu0 0.0
    %249 = vmatprep.subr.mxu0 0.0
    %250 = vmatpush2.msra.mxu0 0.0
    %251 = vmatprep.subr.mxu0 0.0
    %252 = vmatpush2.msra.mxu0 0.0
    %253 = vmatprep.subr.mxu0 0.0
    %254 = vmatpush2.msra.mxu0 0.0
    %255 = vmatprep.subr.mxu0 0.0
    %256 = vmatpush2.msra.mxu0 0.0
    %257 = vmatprep.subr.mxu0 0.0
    %258 = vmatpush2.msra.mxu0 0.0
    %259 = vmatprep.subr.mxu0 0.0
    %260 = vmatpush2.msra.mxu0 0.0
    %261 = vmatprep.subr.mxu0 0.0
    %262 = vmatpush2.msra.mxu0 0.0
    %263 = vmatprep.subr.mxu0 0.0
    %264 = vmatpush2.msra.mxu0 0.0
    %265 = vmatprep.mubr.f32.mxu0 0.0
    %266 = vmatmul.mubr.f32.gmra.mxu0 %v200
    %v267 = vpop.f32.mrf.mxu0
    %v268 = vadd.f32 %v126, %v267
    %v269 = vpop.f32.mrf.mxu0
    %270 = vdwg.mxu0
    %v271 = vmax.f32 %v268, 0.0
    %v273 = vlaneseq
    %v274 = vshrl.u32 %v273, 7
    %v275 = vsub.s32 0, %v274
    %v276 = vrot.slane %v128, %v275
    %v277 = vlaneseq
    %v278 = vshrl.u32 %v277, 7
    %v279 = vsub.s32 1, %v278
    %v280 = vrot.slane %v128, %v279
    %283 = vmatprep.subr.mxu0 %v92
    %284 = vmatpush1.msra.mxu0 %v91
    %285 = vmatprep.subr.mxu0 %v90
    %286 = vmatpush1.msra.mxu0 %v89
    %287 = vmatprep.subr.mxu0 %v88
    %288 = vmatpush1.msra.mxu0 %v87
    %289 = vmatprep.subr.mxu0 %v86
    %290 = vmatpush1.msra.mxu0 %v85
    %291 = vmatprep.subr.mxu0 %v84
    %292 = vmatpush1.msra.mxu0 %v83
    %293 = vmatprep.subr.mxu0 %v82
    %294 = vmatpush1.msra.mxu0 %v81
    %295 = vmatprep.subr.mxu0 %v80
    %296 = vmatpush1.msra.mxu0 %v79
    %297 = vmatprep.subr.mxu0 %v78
    %298 = vmatpush1.msra.mxu0 %v77
    %299 = vmatprep.subr.mxu0 %v76
    %300 = vmatpush1.msra.mxu0 %v75
    %301 = vmatprep.subr.mxu0 %v74
    %302 = vmatpush1.msra.mxu0 %v73
    %303 = vmatprep.subr.mxu0 %v72
    %304 = vmatpush1.msra.mxu0 %v71
    %305 = vmatprep.subr.mxu0 %v70
    %306 = vmatpush1.msra.mxu0 %v69
    %307 = vmatprep.subr.mxu0 %v68
    %308 = vmatpush1.msra.mxu0 %v67
    %309 = vmatprep.subr.mxu0 %v66
    %310 = vmatpush1.msra.mxu0 %v65
    %311 = vmatprep.subr.mxu0 %v64
    %312 = vmatpush1.msra.mxu0 %v63
    %313 = vmatprep.subr.mxu0 %v62
    %314 = vmatpush1.msra.mxu0 %v61
    %315 = vmatprep.subr.mxu0 0.0
    %316 = vmatpush2.msra.mxu0 0.0
    %317 = vmatprep.subr.mxu0 0.0
    %318 = vmatpush2.msra.mxu0 0.0
    %319 = vmatprep.subr.mxu0 0.0
    %320 = vmatpush2.msra.mxu0 0.0
    %321 = vmatprep.subr.mxu0 0.0
    %322 = vmatpush2.msra.mxu0 0.0
    %323 = vmatprep.subr.mxu0 0.0
    %324 = vmatpush2.msra.mxu0 0.0
    %325 = vmatprep.subr.mxu0 0.0
    %326 = vmatpush2.msra.mxu0 0.0
    %327 = vmatprep.subr.mxu0 0.0
    %328 = vmatpush2.msra.mxu0 0.0
    %329 = vmatprep.subr.mxu0 0.0
    %330 = vmatpush2.msra.mxu0 0.0
    %331 = vmatprep.subr.mxu0 0.0
    %332 = vmatpush2.msra.mxu0 0.0
    %333 = vmatprep.subr.mxu0 0.0
    %334 = vmatpush2.msra.mxu0 0.0
    %335 = vmatprep.subr.mxu0 0.0
    %336 = vmatpush2.msra.mxu0 0.0
    %337 = vmatprep.subr.mxu0 0.0
    %338 = vmatpush2.msra.mxu0 0.0
    %339 = vmatprep.subr.mxu0 0.0
    %340 = vmatpush2.msra.mxu0 0.0
    %341 = vmatprep.subr.mxu0 0.0
    %342 = vmatpush2.msra.mxu0 0.0
    %343 = vmatprep.subr.mxu0 0.0
    %344 = vmatpush2.msra.mxu0 0.0
    %345 = vmatprep.subr.mxu0 0.0
    %346 = vmatpush2.msra.mxu0 0.0
    %347 = vmatprep.mubr.f32.mxu0 0.0
    %348 = vmatmul.mubr.f32.gmra.mxu0 %v271
    %v349 = vpop.f32.mrf.mxu0
    %v350 = vadd.f32 %v276, %v349
    %v351 = vpop.f32.mrf.mxu0
    %v352 = vadd.f32 %v280, %v351
    %353 = vdwg.mxu0
    %v354 = vmax.f32 %v350, 0.0
    %v355 = vmax.f32 %v352, 0.0
    %356 = vmatprep.subr.mxu0 0.0
    %357 = vmatpush1.msra.mxu0 %v108
    %358 = vmatprep.subr.mxu0 0.0
    %359 = vmatpush1.msra.mxu0 %v107
    %360 = vmatprep.subr.mxu0 0.0
    %361 = vmatpush1.msra.mxu0 %v106
    %362 = vmatprep.subr.mxu0 0.0
    %363 = vmatpush1.msra.mxu0 %v105
    %364 = vmatprep.subr.mxu0 0.0
    %365 = vmatpush1.msra.mxu0 %v104
    %366 = vmatprep.subr.mxu0 0.0
    %367 = vmatpush1.msra.mxu0 %v103
    %368 = vmatprep.subr.mxu0 0.0
    %369 = vmatpush1.msra.mxu0 %v102
    %370 = vmatprep.subr.mxu0 0.0
    %371 = vmatpush1.msra.mxu0 %v101
    %372 = vmatprep.subr.mxu0 0.0
    %373 = vmatpush1.msra.mxu0 %v100
    %374 = vmatprep.subr.mxu0 0.0
    %375 = vmatpush1.msra.mxu0 %v99
    %376 = vmatprep.subr.mxu0 0.0
    %377 = vmatpush1.msra.mxu0 %v98
    %378 = vmatprep.subr.mxu0 0.0
    %379 = vmatpush1.msra.mxu0 %v97
    %380 = vmatprep.subr.mxu0 0.0
    %381 = vmatpush1.msra.mxu0 %v96
    %382 = vmatprep.subr.mxu0 0.0
    %383 = vmatpush1.msra.mxu0 %v95
    %384 = vmatprep.subr.mxu0 0.0
    %385 = vmatpush1.msra.mxu0 %v94
    %386 = vmatprep.subr.mxu0 0.0
    %387 = vmatpush1.msra.mxu0 %v93
    %388 = vmatprep.subr.mxu0 0.0
    %389 = vmatpush2.msra.mxu0 %v124
    %390 = vmatprep.subr.mxu0 0.0
    %391 = vmatpush2.msra.mxu0 %v123
    %392 = vmatprep.subr.mxu0 0.0
    %393 = vmatpush2.msra.mxu0 %v122
    %394 = vmatprep.subr.mxu0 0.0
    %395 = vmatpush2.msra.mxu0 %v121
    %396 = vmatprep.subr.mxu0 0.0
    %397 = vmatpush2.msra.mxu0 %v120
    %398 = vmatprep.subr.mxu0 0.0
    %399 = vmatpush2.msra.mxu0 %v119
    %400 = vmatprep.subr.mxu0 0.0
    %401 = vmatpush2.msra.mxu0 %v118
    %402 = vmatprep.subr.mxu0 0.0
    %403 = vmatpush2.msra.mxu0 %v117
    %404 = vmatprep.subr.mxu0 0.0
    %405 = vmatpush2.msra.mxu0 %v116
    %406 = vmatprep.subr.mxu0 0.0
    %407 = vmatpush2.msra.mxu0 %v115
    %408 = vmatprep.subr.mxu0 0.0
    %409 = vmatpush2.msra.mxu0 %v114
    %410 = vmatprep.subr.mxu0 0.0
    %411 = vmatpush2.msra.mxu0 %v113
    %412 = vmatprep.subr.mxu0 0.0
    %413 = vmatpush2.msra.mxu0 %v112
    %414 = vmatprep.subr.mxu0 0.0
    %415 = vmatpush2.msra.mxu0 %v111
    %416 = vmatprep.subr.mxu0 0.0
    %417 = vmatpush2.msra.mxu0 %v110
    %418 = vmatprep.subr.mxu0 0.0
    %419 = vmatpush2.msra.mxu0 %v109
    %420 = vmatprep.mubr.f32.mxu0 %v355
    %421 = vmatmul.mubr.f32.gmra.mxu0 %v354
    %v422 = vpop.f32.mrf.mxu0
    %v423 = vadd.f32 %v129, %v422
    %v424 = vpop.f32.mrf.mxu0
    %425 = vdwg.mxu0
    %426 = vst [vmem:[%s3] sm:$0xff] %v423
    // Predicated region
    $region18: #{fc_actor_critic_forward.1} parent=1 // pred_check
      _
    $region19: #{fc_actor_critic_forward.1} parent=1 // pred_check_branch
      %428 = sbr.rel (0) target = $region21
    $region20: #{fc_actor_critic_forward.1} parent=1 // pred_region
      _
    $region21: #{fc_actor_critic_forward.1} parent=1 // pred_fallthru
      _
    // Predicated region
    $region22: #{fc_actor_critic_forward.1} parent=1 // pred_check
      _
    $region23: #{fc_actor_critic_forward.1} parent=1 // pred_check_branch
      %430 = sbr.rel (0) target = $region25
    $region24: #{fc_actor_critic_forward.1} parent=1 // pred_region
      _
    $region25: #{fc_actor_critic_forward.1} parent=1 // pred_fallthru
      _
    %431 = vsyncpa [#allocation3], 1

</llo_original>
